<compile_context>
chip_gen: v6e
topology: v6e:2x2x1
jax: 0.10.0
libtpu: 0.0.40
codegen_flags: <defaults>
</compile_context>

<pallas_src>
import functools

import jax
import jax.numpy as jnp
from jax.experimental import pallas as pl
from jax.experimental.pallas import tpu as pltpu

LN_EPS = 1e-5  # nn.LayerNorm default


def _round_up(n, m):
    return ((n + m - 1) // m) * m


def _row_tile(r):
    """Row tile: 512 when the grid still has >=4 steps, else 256; tiny inputs
    just shrink the tile (multiple of 8) instead of padding."""
    tm = 512 if r >= 4 * 512 else 256
    return min(tm, _round_up(r, 8))


def _feature_tile(f):
    """Keep F resident when small; otherwise 512-wide tiles (multiple of 256
    for the v6e/v7x 2x256^2 MXU)."""
    return f if f <= 512 else 512


def _ln_stats(x_f32):
    """Two-pass mean / inverse-stddev of a (tm, D) f32 block."""
    d = x_f32.shape[-1]
    mean = jnp.sum(x_f32, axis=-1, keepdims=True) * (1.0 / d)
    xc = x_f32 - mean
    var = jnp.sum(xc * xc, axis=-1, keepdims=True) * (1.0 / d)  # biased (PyTorch)
    inv = jax.lax.rsqrt(var + LN_EPS)
    return xc, inv


# --------------------------------------------------------------------------
# Fused kernel: LayerNorm (gamma/beta pre-folded into W, b) + Linear.
# --------------------------------------------------------------------------
def _prenorm_linear_kernel(x_ref, w_ref, b_ref, o_ref):
    xc, inv = _ln_stats(x_ref[...].astype(jnp.float32))       # (tm, D)
    y = (xc * inv).astype(w_ref.dtype)                          # bf16 for MXU
    acc = jnp.dot(y, w_ref[...], preferred_element_type=jnp.float32)  # (tm, tn)
    o_ref[...] = (acc + b_ref[...].astype(jnp.float32)).astype(o_ref.dtype)


@jax.jit
def prenorm_linear_pallas(x2d, w, bias):
    """x2d: (R, D); w: (D, F) folded weight (bf16); bias: (1, F) folded bias."""
    R, D = x2d.shape
    _, F = w.shape
    tm = _row_tile(R)
    tn = _feature_tile(F)
    n_r = pl.cdiv(R, tm)
    n_f = pl.cdiv(F, tn)

    invariant = n_f == 1  # weight/bias blocks never change across the grid
    if invariant:
        w_spec = pl.BlockSpec((D, tn), lambda i, j: (0, j),
                              pipeline_mode=pl.Buffered(1))
        b_spec = pl.BlockSpec((1, tn), lambda i, j: (0, j),
                              pipeline_mode=pl.Buffered(1))
        w_bufs = 1
    else:
        w_spec = pl.BlockSpec((D, tn), lambda i, j: (0, j))
        b_spec = pl.BlockSpec((1, tn), lambda i, j: (0, j))
        w_bufs = 2

    est = (2 * tm * D * x2d.dtype.itemsize          # activation double buffer
           + 2 * tm * tn * x2d.dtype.itemsize       # output double buffer
           + w_bufs * D * tn * w.dtype.itemsize     # weight buffer(s)
           + w_bufs * tn * 4)                       # bias buffer(s)
    vmem_limit = int(min(max(2 * est + (4 << 20), 16 << 20), 64 << 20))

    return pl.pallas_call(
        _prenorm_linear_kernel,
        out_shape=jax.ShapeDtypeStruct((R, F), x2d.dtype),
        grid=(n_r, n_f),
        in_specs=[
            pl.BlockSpec((tm, D), lambda i, j: (i, 0)),   # activations
            w_spec,                                        # folded weight
            b_spec,                                        # folded bias
        ],
        out_specs=pl.BlockSpec((tm, tn), lambda i, j: (i, j)),
        compiler_params=pltpu.CompilerParams(
            dimension_semantics=("parallel", "parallel"),
            vmem_limit_bytes=vmem_limit),
    )(x2d, w, bias)


# --------------------------------------------------------------------------
# Standalone LayerNorm kernel (generic-fn fallback path).
# --------------------------------------------------------------------------
def _layernorm_kernel(x_ref, g_ref, b_ref, o_ref):
    xc, inv = _ln_stats(x_ref[...].astype(jnp.float32))
    o_ref[...] = (xc * inv * g_ref[...].astype(jnp.float32)
                  + b_ref[...].astype(jnp.float32)).astype(o_ref.dtype)


@jax.jit
def layernorm_pallas(x2d, gamma, beta):
    R, D = x2d.shape
    tm = _row_tile(R)
    n_r = pl.cdiv(R, tm)
    est = 4 * tm * D * x2d.dtype.itemsize + 2 * D * 4
    vmem_limit = int(min(max(2 * est + (4 << 20), 16 << 20), 64 << 20))
    return pl.pallas_call(
        _layernorm_kernel,
        out_shape=jax.ShapeDtypeStruct((R, D), x2d.dtype),
        grid=(n_r,),
        in_specs=[
            pl.BlockSpec((tm, D), lambda i: (i, 0)),
            pl.BlockSpec((1, D), lambda i: (0, 0), pipeline_mode=pl.Buffered(1)),
            pl.BlockSpec((1, D), lambda i: (0, 0), pipeline_mode=pl.Buffered(1)),
        ],
        out_specs=pl.BlockSpec((tm, D), lambda i: (i, 0)),
        compiler_params=pltpu.CompilerParams(
            dimension_semantics=("parallel",),
            vmem_limit_bytes=vmem_limit),
    )(x2d, gamma, beta)


# --------------------------------------------------------------------------
# Standalone Pallas Linear (used only on the generic fallback path).
# --------------------------------------------------------------------------
def _linear_kernel(x_ref, w_ref, b_ref, o_ref):
    acc = jnp.dot(x_ref[...].astype(w_ref.dtype), w_ref[...],
                  preferred_element_type=jnp.float32)
    o_ref[...] = (acc + b_ref[...].astype(jnp.float32)).astype(o_ref.dtype)


@jax.jit
def linear_pallas(x2d, w, bias):
    R, D = x2d.shape
    _, F = w.shape
    tm = _row_tile(R)
    tn = _feature_tile(F)
    n_r = pl.cdiv(R, tm)
    n_f = pl.cdiv(F, tn)
    if n_f == 1:
        w_spec = pl.BlockSpec((D, tn), lambda i, j: (0, j),
                              pipeline_mode=pl.Buffered(1))
        b_spec = pl.BlockSpec((1, tn), lambda i, j: (0, j),
                              pipeline_mode=pl.Buffered(1))
        w_bufs = 1
    else:
        w_spec = pl.BlockSpec((D, tn), lambda i, j: (0, j))
        b_spec = pl.BlockSpec((1, tn), lambda i, j: (0, j))
        w_bufs = 2
    est = (2 * tm * D * x2d.dtype.itemsize + 2 * tm * tn * x2d.dtype.itemsize
           + w_bufs * D * tn * w.dtype.itemsize + w_bufs * tn * 4)
    vmem_limit = int(min(max(2 * est + (4 << 20), 16 << 20), 64 << 20))
    return pl.pallas_call(
        _linear_kernel,
        out_shape=jax.ShapeDtypeStruct((R, F), x2d.dtype),
        grid=(n_r, n_f),
        in_specs=[pl.BlockSpec((tm, D), lambda i, j: (i, 0)), w_spec, b_spec],
        out_specs=pl.BlockSpec((tm, tn), lambda i, j: (i, j)),
        compiler_params=pltpu.CompilerParams(
            dimension_semantics=("parallel", "parallel"),
            vmem_limit_bytes=vmem_limit),
    )(x2d, w, bias)


# --------------------------------------------------------------------------
# Module wrappers
# --------------------------------------------------------------------------
class LinearPallas:
    """Linear(dim, out) with a bf16 weight; recognized by PreNormPallas so the
    LayerNorm can be folded/fused into the same kernel."""

    def __init__(self, w, b, weight_dtype=jnp.bfloat16):
        self.w = jnp.asarray(w).astype(weight_dtype)                 # (D, F)
        self.b = jnp.asarray(b).reshape(1, -1).astype(jnp.float32)   # (1, F)

    def __call__(self, x, **kwargs):
        B, N, D = x.shape
        y = linear_pallas(x.reshape(B * N, D), self.w, self.b)
        return y.reshape(B, N, -1)


class PreNormPallas:
    """out = fn(LayerNorm(x), **kwargs).

    If `fn` is a LinearPallas (the common ViT case), gamma/beta are folded into
    the linear weights and LayerNorm + Linear run as ONE fused Pallas kernel so
    the normalized activations never round-trip HBM.  Any other callable `fn`
    gets the standalone LayerNorm kernel followed by fn (same semantics as the
    PyTorch module, which accepts an arbitrary fn).
    """

    def __init__(self, dim, fn):
        # nn.LayerNorm(dim) init: weight = ones, bias = zeros.
        self.gamma = jnp.ones((dim,), jnp.float32)
        self.beta = jnp.zeros((dim,), jnp.float32)
        self.fn = fn

    def _folded_params(self):
        # W' = diag(gamma) @ W ; b' = beta @ W + b  (tiny, done outside the kernel)
        w32 = self.fn.w.astype(jnp.float32)
        w_f = (self.gamma[:, None] * w32).astype(self.fn.w.dtype)
        b_f = (self.beta @ w32 + self.fn.b.reshape(-1)).reshape(1, -1)
        return w_f, b_f.astype(jnp.float32)

    def __call__(self, x, **kwargs):
        B, N, D = x.shape
        x2d = x.reshape(B * N, D)
        if isinstance(self.fn, LinearPallas) and not kwargs:
            w_f, b_f = self._folded_params()
            out = prenorm_linear_pallas(x2d, w_f, b_f)
            return out.reshape(B, N, -1)
        # Generic path: LayerNorm kernel, then the arbitrary injected fn.
        y = layernorm_pallas(x2d, self.gamma.reshape(1, -1), self.beta.reshape(1, -1))
        return self.fn(y.reshape(B, N, D), **kwargs)


# --------------------------------------------------------------------------
# Demo / checks
# --------------------------------------------------------------------------
if __name__ == "__main__":
    B, N, D = 2, 8, 128  # batch, tokens, embed dim
    key = jax.random.PRNGKey(0)
    kx, kw, kb, kx2, kg, kbt = jax.random.split(key, 6)

    x = jax.random.normal(kx, (B, N, D), dtype=jnp.float32)
    w = jax.random.normal(kw, (D, D), dtype=jnp.float32) * 0.02
    b = jax.random.normal(kb, (D,), dtype=jnp.float32) * 0.02

    fn = LinearPallas(w, b)             # stores weight in bf16
    module = PreNormPallas(D, fn)

    def ref_ln(xin, gamma, beta):
        mean = jnp.mean(xin, axis=-1, keepdims=True)
        var = jnp.mean((xin - mean) ** 2, axis=-1, keepdims=True)
        return (xin - mean) * jax.lax.rsqrt(var + LN_EPS) * gamma + beta

    def ref_prenorm_linear(xin, gamma, beta):
        yn = ref_ln(xin, gamma, beta)
        return jnp.einsum("bnd,df->bnf", yn, w) + b.reshape(1, 1, -1)

    ones = jnp.ones((D,), jnp.float32)
    zeros = jnp.zeros((D,), jnp.float32)
    # bf16 weight / activation cast inside the kernel -> compare vs the pure-f32
    # PyTorch-style reference at mixed-precision tolerance.
    TOL = dict(atol=3e-2, rtol=3e-2)

    # 1) Fused LN + Linear path (default LayerNorm init: gamma=1, beta=0).
    out = jax.block_until_ready(module(x))
    assert out.shape == (B, N, D)
    assert jnp.allclose(out, ref_prenorm_linear(x, ones, zeros), **TOL)

    # 2) Ragged token count (R = 18, not a multiple of the tile): exercises the
    #    partial-last-block path (no host padding; OOB writes masked by Pallas).
    x_r = jax.random.normal(kx2, (B, 9, D), dtype=jnp.float32)
    out_r = jax.block_until_ready(module(x_r))
    assert out_r.shape == (B, 9, D)
    assert jnp.allclose(out_r, ref_prenorm_linear(x_r, ones, zeros), **TOL)

    # 3) Non-trivial gamma/beta: checks the fold-into-weights path.
    module.gamma = 1.0 + 0.1 * jax.random.normal(kg, (D,), dtype=jnp.float32)
    module.beta = 0.1 * jax.random.normal(kbt, (D,), dtype=jnp.float32)
    out_f = jax.block_until_ready(module(x))
    assert jnp.allclose(out_f, ref_prenorm_linear(x, module.gamma, module.beta), **TOL)
    module.gamma, module.beta = ones, zeros

    # 4) Generic (non-fused) path: standalone LN kernel + arbitrary fn.
    gen = PreNormPallas(D, lambda y, **kw: jax.nn.gelu(y))
    out_g = jax.block_until_ready(gen(x))
    assert jnp.allclose(out_g, jax.nn.gelu(ref_ln(x, ones, zeros)),
                        atol=1e-4, rtol=1e-4)

    print("KERNEL_OK")
</pallas_src>

<mosaic_0001>
module attributes {stable_mosaic.version = 11 : i64} {
  func.func @_prenorm_linear_kernel(%arg0: i32, %arg1: i32, %arg2: memref<16x128xf32, #tpu.memory_space<vmem>>, %arg3: memref<128x128xbf16, #tpu.memory_space<vmem>>, %arg4: memref<1x128xf32, #tpu.memory_space<vmem>>, %arg5: memref<16x128xf32, #tpu.memory_space<vmem>>) attributes {dimension_semantics = [#tpu.dimension_semantics<parallel>, #tpu.dimension_semantics<parallel>], iteration_bounds = array<i64: 1, 1>, scalar_prefetch = 0 : i64, scratch_operands = 0 : i64, tpu.core_type = #tpu.core_type<tc>, window_params = [{transform_indices = @transform_0, window_bounds = array<i64: 16, 128>}, {pipeline_mode = #tpu.pipeline_mode<synchronous>, transform_indices = @transform_1, window_bounds = array<i64: 128, 128>}, {pipeline_mode = #tpu.pipeline_mode<synchronous>, transform_indices = @transform_2, window_bounds = array<i64: 1, 128>}, {transform_indices = @transform_3, window_bounds = array<i64: 16, 128>}]} {
    %c0 = arith.constant 0 : index
    %c0_0 = arith.constant 0 : index
    %0 = vector.load %arg2[%c0, %c0_0] : memref<16x128xf32, #tpu.memory_space<vmem>>, vector<16x128xf32>
    %cst = arith.constant dense<0.000000e+00> : vector<16xf32>
    %1 = vector.multi_reduction <add>, %0, %cst [1] : vector<16x128xf32> to vector<16xf32>
    %2 = vector.shape_cast %1 : vector<16xf32> to vector<16x1xf32>
    %cst_1 = arith.constant 7.812500e-03 : f32
    %3 = vector.broadcast %cst_1 : f32 to vector<16x1xf32>
    %4 = arith.mulf %2, %3 : vector<16x1xf32>
    %5 = vector.broadcast %4 : vector<16x1xf32> to vector<16x128xf32>
    %6 = arith.subf %0, %5 : vector<16x128xf32>
    %7 = arith.mulf %6, %6 : vector<16x128xf32>
    %cst_2 = arith.constant dense<0.000000e+00> : vector<16xf32>
    %8 = vector.multi_reduction <add>, %7, %cst_2 [1] : vector<16x128xf32> to vector<16xf32>
    %9 = vector.shape_cast %8 : vector<16xf32> to vector<16x1xf32>
    %cst_3 = arith.constant 7.812500e-03 : f32
    %10 = vector.broadcast %cst_3 : f32 to vector<16x1xf32>
    %11 = arith.mulf %9, %10 : vector<16x1xf32>
    %cst_4 = arith.constant 9.99999974E-6 : f32
    %12 = vector.broadcast %cst_4 : f32 to vector<16x1xf32>
    %13 = arith.addf %11, %12 : vector<16x1xf32>
    %14 = math.rsqrt %13 : vector<16x1xf32>
    %15 = vector.broadcast %14 : vector<16x1xf32> to vector<16x128xf32>
    %16 = arith.mulf %6, %15 : vector<16x128xf32>
    %17 = arith.truncf %16 : vector<16x128xf32> to vector<16x128xbf16>
    %c0_5 = arith.constant 0 : index
    %c0_6 = arith.constant 0 : index
    %18 = vector.load %arg3[%c0_5, %c0_6] : memref<128x128xbf16, #tpu.memory_space<vmem>>, vector<128x128xbf16>
    %cst_7 = arith.constant dense<0.000000e+00> : vector<16x128xf32>
    %19 = tpu.matmul %17, %18, %cst_7 {dimension_numbers = #tpu.dot_dimension_numbers<[1], [0], [0], [1], [0, 0, 1, 1], [], []>} : vector<16x128xbf16>, vector<128x128xbf16>, vector<16x128xf32> -> vector<16x128xf32>
    %c0_8 = arith.constant 0 : index
    %c0_9 = arith.constant 0 : index
    %20 = vector.load %arg4[%c0_8, %c0_9] : memref<1x128xf32, #tpu.memory_space<vmem>>, vector<1x128xf32>
    %21 = vector.broadcast %20 : vector<1x128xf32> to vector<16x128xf32>
    %22 = arith.addf %19, %21 : vector<16x128xf32>
    %c0_10 = arith.constant 0 : index
    %c0_11 = arith.constant 0 : index
    %23 = vector.load %arg5[%c0_10, %c0_11] : memref<16x128xf32, #tpu.memory_space<vmem>>, vector<16x128xf32>
    tpu.vector_store %arg5[%c0_10, %c0_11], %22 {strides = array<i32>} : memref<16x128xf32, #tpu.memory_space<vmem>>, vector<16x128xf32>,
    return
  }
  func.func @transform_0(%arg0: i32, %arg1: i32) -> (i32, i32) {
    %c0_i32 = arith.constant 0 : i32
    %c0_i32_0 = arith.constant 0 : i32
    return %arg0, %c0_i32 : i32, i32
  }
  func.func @transform_1(%arg0: i32, %arg1: i32) -> (i32, i32) {
    %c0_i32 = arith.constant 0 : i32
    %c0_i32_0 = arith.constant 0 : i32
    return %c0_i32, %arg1 : i32, i32
  }
  func.func @transform_2(%arg0: i32, %arg1: i32) -> (i32, i32) {
    %c0_i32 = arith.constant 0 : i32
    %c0_i32_0 = arith.constant 0 : i32
    return %c0_i32, %arg1 : i32, i32
  }
  func.func @transform_3(%arg0: i32, %arg1: i32) -> (i32, i32) {
    %c0_i32 = arith.constant 0 : i32
    return %arg0, %arg1 : i32, i32
  }
}

</mosaic_0001>

<llo_original>
// kernel: prenorm_linear_pallas.1
$region0: #{prenorm_linear_pallas.1}
  #allocation0 [shape = 'u32[]', space=smem, size = 0x4, offset = 0x4, fixed_abs, tag = 'smem constant byte address 0x4 - core index']
  #allocation1 [shape = 'u32[144,128]{1,0:T(1,128)}', space=vmem, size = 0x12000, scoped, tag = 'internal scratch']
  %s0 = inlined_call_operand.hbm [shape: f32[16,128], index: 0, kind: input, shape index: {}]
  %s1 = inlined_call_operand.hbm [shape: bf16[128,128], index: 1, kind: input, shape index: {}]
  %s2 = inlined_call_operand.vmem [shape: f32[1,128], index: 2, kind: input, shape index: {}]
  %s3 = inlined_call_operand.hbm [shape: f32[16,128], index: 3, kind: output, shape index: {}]
  %s4 = sld [smem:[#allocation0]]
  $region30: #{prenorm_linear_pallas.1} parent=0
    _
  %s6 = ssub.s32 1, %s4
  %s7 = scalar_select 0, %s6, %s4
  $region1: #{prenorm_linear_pallas.1} parent=0
    #allocation2 [shape = 'u8[8192]{0}', space=vmem, size = 0x2000, scoped, tag = 'input window, operand 0, single buffered']
    #allocation3 [shape = 's32[1]{0}', space=sflag, size = 0x4, scoped, tag = 'scoped memory for prenorm_linear_pallas.1']
    #allocation4 [shape = 's32[1]{0}', space=sflag, size = 0x4, scoped, tag = 'scoped memory for prenorm_linear_pallas.1']
    #allocation5 [shape = 'u8[32768]{0}', space=vmem, size = 0x8000, scoped, tag = 'input window, operand 1, single buffered']
    #allocation6 [shape = 's32[1]{0}', space=sflag, size = 0x4, scoped, tag = 'scoped memory for prenorm_linear_pallas.1']
    #allocation7 [shape = 'u8[8192]{0}', space=vmem, size = 0x2000, scoped, tag = 'output window, operand 0, single buffered']
    %8 = vsyncpa [#allocation3], 0
    %9 = vsyncpa [#allocation6], 0
    %10 = vsyncpa [#allocation4], 0
    // Predicated region
    $region2: #{prenorm_linear_pallas.1} parent=1 // pred_check
      _
    $region3: #{prenorm_linear_pallas.1} parent=1 // pred_check_branch
      %12 = sbr.rel (0) target = $region5
    $region4: #{prenorm_linear_pallas.1} parent=1 // pred_region
      %s14 = ssub.s32 256, 256
      %15 = vsyncadd [#allocation3], %s14
      %s16 = sshll.u32 [#allocation2], 4
      %s17 = int_to_ptr.vmem [resolvable:$true] %s16
      %22 = dma.hbm_to_vmem [thread:$0]  %s0, 256, %s17, [#allocation3], 128, 128, 8
    $region5: #{prenorm_linear_pallas.1} parent=1 // pred_fallthru
      _
    // Predicated region
    $region6: #{prenorm_linear_pallas.1} parent=1 // pred_check
      _
    $region7: #{prenorm_linear_pallas.1} parent=1 // pred_check_branch
      %24 = sbr.rel (0) target = $region9
    $region8: #{prenorm_linear_pallas.1} parent=1 // pred_region
      %s26 = ssub.s32 1024, 1024
      %27 = vsyncadd [#allocation6], %s26
      %s28 = sshll.u32 [#allocation5], 4
      %s29 = int_to_ptr.vmem [resolvable:$true] %s28
      %34 = dma.hbm_to_vmem [thread:$0]  %s1, 1024, %s29, [#allocation6], 64, 64, 4
    $region9: #{prenorm_linear_pallas.1} parent=1 // pred_fallthru
      _
    // Predicated region
    $region10: #{prenorm_linear_pallas.1} parent=1 // pred_check
      _
    $region11: #{prenorm_linear_pallas.1} parent=1 // pred_check_branch
      %36 = sbr.rel (0) target = $region13
    $region12: #{prenorm_linear_pallas.1} parent=1 // pred_region
      _
    $region13: #{prenorm_linear_pallas.1} parent=1 // pred_fallthru
      _
    // Predicated region
    $region14: #{prenorm_linear_pallas.1} parent=1 // pred_check
      _
    $region15: #{prenorm_linear_pallas.1} parent=1 // pred_check_branch
      %38 = sbr.rel (0) target = $region17
    $region16: #{prenorm_linear_pallas.1} parent=1 // pred_region
      %39 = dma.done [#allocation3], 256
    $region17: #{prenorm_linear_pallas.1} parent=1 // pred_fallthru
      _
    // Predicated region
    $region18: #{prenorm_linear_pallas.1} parent=1 // pred_check
      _
    $region19: #{prenorm_linear_pallas.1} parent=1 // pred_check_branch
      %41 = sbr.rel (0) target = $region21
    $region20: #{prenorm_linear_pallas.1} parent=1 // pred_region
      %42 = dma.done [#allocation6], 1024
    $region21: #{prenorm_linear_pallas.1} parent=1 // pred_fallthru
      _
    %v44 = vld [vmem:[#allocation2] sm:$0xff]
    %v45 = vld [vmem:[#allocation2 + $0x8] sm:$0xff]
    %46 = vadd.xlane.f32.xlu0 %v44
    %v47 = vpop.xlane.xlu0 %46
    %48 = vadd.xlane.f32.xlu0 %v45
    %v49 = vpop.xlane.xlu0 %48
    %v50 = vmul.f32 %v47, 0.0078125
    %v51 = vmul.f32 %v49, 0.0078125
    %v52 = vsub.f32 %v44, %v50
    %v53 = vsub.f32 %v45, %v51
    %v54 = vmul.f32 %v52, %v52
    %v55 = vmul.f32 %v53, %v53
    %56 = vadd.xlane.f32.xlu0 %v54
    %v57 = vpop.xlane.xlu0 %56
    %58 = vadd.xlane.f32.xlu0 %v55
    %v59 = vpop.xlane.xlu0 %58
    %v60 = vmul.f32 %v57, 0.0078125
    %v61 = vmul.f32 %v59, 0.0078125
    %v62 = vadd.f32 %v60, 1e-05
    %v63 = vadd.f32 %v61, 1e-05
    %v64 = vrsqrt.pop %v62
    %v65 = vrsqrt.pop %v63
    %v66 = vmul.f32 %v52, %v64
    %v67 = vmul.f32 %v53, %v65
    %v68 = vpack.c.bf16 %v67, %v66
    %v69 = vld [vmem:[#allocation5] sm:$0xf]
    %v70 = vld [vmem:[#allocation5 + $0x4] sm:$0xf]
    %v71 = vld [vmem:[#allocation5 + $0x8] sm:$0xf]
    %v72 = vld [vmem:[#allocation5 + $0xc] sm:$0xf]
    %v73 = vld [vmem:[#allocation5 + $0x10] sm:$0xf]
    %v74 = vld [vmem:[#allocation5 + $0x14] sm:$0xf]
    %v75 = vld [vmem:[#allocation5 + $0x18] sm:$0xf]
    %v76 = vld [vmem:[#allocation5 + $0x1c] sm:$0xf]
    %v77 = vld [vmem:[#allocation5 + $0x20] sm:$0xf]
    %v78 = vld [vmem:[#allocation5 + $0x24] sm:$0xf]
    %v79 = vld [vmem:[#allocation5 + $0x28] sm:$0xf]
    %v80 = vld [vmem:[#allocation5 + $0x2c] sm:$0xf]
    %v81 = vld [vmem:[#allocation5 + $0x30] sm:$0xf]
    %v82 = vld [vmem:[#allocation5 + $0x34] sm:$0xf]
    %v83 = vld [vmem:[#allocation5 + $0x38] sm:$0xf]
    %v84 = vld [vmem:[#allocation5 + $0x3c] sm:$0xf]
    %v85 = vld [vmem:[%s2] sm:$0x1]
    %v87 = vlaneseq
    %v88 = vshrl.u32 %v87, 7
    %v89 = vsub.s32 0, %v88
    %v90 = vrot.slane %v85, %v89
    %v108 = vunpack.c.l.b16 %v69
    %v109 = vunpack.c.l.b16 %v70
    %v110 = vunpack.c.l.b16 %v71
    %v111 = vunpack.c.l.b16 %v72
    %v112 = vunpack.c.l.b16 %v73
    %v113 = vunpack.c.l.b16 %v74
    %v114 = vunpack.c.l.b16 %v75
    %v115 = vunpack.c.l.b16 %v76
    %v116 = vunpack.c.l.b16 %v77
    %v117 = vunpack.c.l.b16 %v78
    %v118 = vunpack.c.l.b16 %v79
    %v119 = vunpack.c.l.b16 %v80
    %v120 = vunpack.c.l.b16 %v81
    %v121 = vunpack.c.l.b16 %v82
    %v122 = vunpack.c.l.b16 %v83
    %v123 = vunpack.c.l.b16 %v84
    %v124 = vpack.c.b16 %v109, %v108
    %v125 = vpack.c.b16 %v111, %v110
    %v126 = vpack.c.b16 %v113, %v112
    %v127 = vpack.c.b16 %v115, %v114
    %v128 = vpack.c.b16 %v117, %v116
    %v129 = vpack.c.b16 %v119, %v118
    %v130 = vpack.c.b16 %v121, %v120
    %v131 = vpack.c.b16 %v123, %v122
    %140 = vmatprep.subr.bf16.mxu0 0
    %141 = vmatpush1.bf16.msra.mxu0 %v131
    %142 = vmatprep.subr.bf16.mxu0 0
    %143 = vmatpush1.bf16.msra.mxu0 %v130
    %144 = vmatprep.subr.bf16.mxu0 0
    %145 = vmatpush1.bf16.msra.mxu0 %v129
    %146 = vmatprep.subr.bf16.mxu0 0
    %147 = vmatpush1.bf16.msra.mxu0 %v128
    %148 = vmatprep.subr.bf16.mxu0 0
    %149 = vmatpush1.bf16.msra.mxu0 %v127
    %150 = vmatprep.subr.bf16.mxu0 0
    %151 = vmatpush1.bf16.msra.mxu0 %v126
    %152 = vmatprep.subr.bf16.mxu0 0
    %153 = vmatpush1.bf16.msra.mxu0 %v125
    %154 = vmatprep.subr.bf16.mxu0 0
    %155 = vmatpush1.bf16.msra.mxu0 %v124
    %156 = vmatprep.subr.bf16.mxu0 0
    %157 = vmatpush2.bf16.msra.mxu0 0
    %158 = vmatprep.subr.bf16.mxu0 0
    %159 = vmatpush2.bf16.msra.mxu0 0
    %160 = vmatprep.subr.bf16.mxu0 0
    %161 = vmatpush2.bf16.msra.mxu0 0
    %162 = vmatprep.subr.bf16.mxu0 0
    %163 = vmatpush2.bf16.msra.mxu0 0
    %164 = vmatprep.subr.bf16.mxu0 0
    %165 = vmatpush2.bf16.msra.mxu0 0
    %166 = vmatprep.subr.bf16.mxu0 0
    %167 = vmatpush2.bf16.msra.mxu0 0
    %168 = vmatprep.subr.bf16.mxu0 0
    %169 = vmatpush2.bf16.msra.mxu0 0
    %170 = vmatprep.subr.bf16.mxu0 0
    %171 = vmatpush2.bf16.msra.mxu0 0
    %172 = vmatprep.mubr.bf16.mxu0 0
    %173 = vmatmul.mubr.bf16.gmra.mxu0 %v68
    %v174 = vpop.f32.mrf.mxu0
    %v175 = vadd.f32 %v90, %v174
    %v176 = vpop.f32.mrf.mxu0
    %v177 = vpop.f32.mrf.mxu0
    %v178 = vadd.f32 %v90, %v177
    %v179 = vpop.f32.mrf.mxu0
    %180 = vdwg.mxu0
    %181 = vst [vmem:[#allocation7] sm:$0xff] %v175
    %182 = vst [vmem:[#allocation7 + $0x8] sm:$0xff] %v178
    // Predicated region
    $region22: #{prenorm_linear_pallas.1} parent=1 // pred_check
      _
    $region23: #{prenorm_linear_pallas.1} parent=1 // pred_check_branch
      %184 = sbr.rel (0) target = $region25
    $region24: #{prenorm_linear_pallas.1} parent=1 // pred_region
      %s186 = ssub.s32 256, 256
      %187 = vsyncadd [#allocation4], %s186
      %s188 = sshll.u32 [#allocation7], 4
      %s189 = int_to_ptr.vmem [resolvable:$true] %s188
      %194 = dma.vmem_to_hbm [thread:$0]  %s189, 256, %s3, [#allocation4], 128, 128, 8
    $region25: #{prenorm_linear_pallas.1} parent=1 // pred_fallthru
      _
    // Predicated region
    $region26: #{prenorm_linear_pallas.1} parent=1 // pred_check
      _
    $region27: #{prenorm_linear_pallas.1} parent=1 // pred_check_branch
      %196 = sbr.rel (0) target = $region29
    $region28: #{prenorm_linear_pallas.1} parent=1 // pred_region
      %197 = dma.done [#allocation4], 256
    $region29: #{prenorm_linear_pallas.1} parent=1 // pred_fallthru
      _
    %198 = vsyncpa [#allocation3], 1
    %199 = vsyncpa [#allocation6], 1
    %200 = vsyncpa [#allocation4], 1

</llo_original>
